<compile_context>
chip_gen: v6e
topology: v6e:2x2x1
jax: 0.10.0
libtpu: 0.0.40
codegen_flags: <defaults>
</compile_context>

<pallas_src>
import functools

import jax
import jax.numpy as jnp
from jax.experimental import pallas as pl
from jax.experimental.pallas import tpu as pltpu

LANE = 128


def _round_up(n, m):
    return ((n + m - 1) // m) * m


def _pad2(a, r, c):
    out = jnp.zeros((r, c), a.dtype)
    return out.at[: a.shape[0], : a.shape[1]].set(a)


def invariant_kernel(x_ref, w1_ref, b1_ref, w2_ref, b2_ref,
                     wr1_ref, br1_ref, wr2_ref, br2_ref, o_ref, *, set_size):
    # x_ref: (TB*S, Din_p) bf16 block for this batch tile.
    x = x_ref[...]

    # ---- phi layer 1: ReLU(x @ w1 + b1), f32 accumulation on the MXU ----
    h1 = jnp.dot(x, w1_ref[...], preferred_element_type=jnp.float32) + b1_ref[...]
    h1 = jnp.maximum(h1, 0.0)                                   # (TB*S, H_p) f32

    # ---- pool over the set dim BEFORE the (linear) second phi layer ----
    rows, hp = h1.shape
    tb = rows // set_size
    pooled = jnp.sum(h1.reshape(tb, set_size, hp), axis=1)      # (TB, H_p) f32

    # ---- phi layer 2 applied to the pooled sum (linearity): + S * b2 ----
    pooled = (jnp.dot(pooled.astype(jnp.bfloat16), w2_ref[...],
                      preferred_element_type=jnp.float32)
              + float(set_size) * b2_ref[...])                  # (TB, H_p) f32

    # ---- rho: Linear -> ReLU -> Linear ----
    r = jnp.dot(pooled.astype(jnp.bfloat16), wr1_ref[...],
                preferred_element_type=jnp.float32) + br1_ref[...]
    r = jnp.maximum(r, 0.0)
    out = jnp.dot(r.astype(jnp.bfloat16), wr2_ref[...],
                  preferred_element_type=jnp.float32) + br2_ref[...]  # (TB, Dout_p)

    o_ref[...] = out.astype(o_ref.dtype)


def invariant_model(x, params, *, tb=8):
    """Full InvariantModel forward as one gridded, pipelined pallas_call."""
    B, S, d_in = x.shape
    hidden = params["w1"].shape[1]
    d_out = params["wr2"].shape[1]

    din_p = _round_up(d_in, LANE)
    h_p = _round_up(hidden, LANE)
    dout_p = _round_up(d_out, LANE)

    # Zero-pad weights/biases to lane width; matmul weights go to bf16
    # (f32 accumulation inside the kernel), biases stay f32.
    w1 = _pad2(params["w1"], din_p, h_p).astype(jnp.bfloat16)
    b1 = _pad2(params["b1"], 1, h_p)
    w2 = _pad2(params["w2"], h_p, h_p).astype(jnp.bfloat16)
    b2 = _pad2(params["b2"], 1, h_p)
    wr1 = _pad2(params["wr1"], h_p, h_p).astype(jnp.bfloat16)
    br1 = _pad2(params["br1"], 1, h_p)
    wr2 = _pad2(params["wr2"], h_p, dout_p).astype(jnp.bfloat16)
    br2 = _pad2(params["br2"], 1, dout_p)

    # Pad batch to a multiple of the batch tile; flatten (B,S,D) -> (B*S,D)
    # in the wrapper (no-op on contiguous HBM), cast x stream to bf16.
    b_pad = _round_up(B, tb)
    x_p = jnp.zeros((b_pad, S, din_p), x.dtype).at[:B, :, :d_in].set(x)
    x2 = x_p.reshape(b_pad * S, din_p).astype(jnp.bfloat16)

    rows = tb * S
    assert rows % 8 == 0, "batch-tile rows (tb*S) must be a multiple of 8"
    grid = (b_pad // tb,)

    kernel = functools.partial(invariant_kernel, set_size=S)

    def wspec(shape):
        return pl.BlockSpec(shape, lambda i: (0, 0))   # resident across grid

    out = pl.pallas_call(
        kernel,
        out_shape=jax.ShapeDtypeStruct((b_pad, dout_p), jnp.float32),
        grid=grid,
        in_specs=[
            pl.BlockSpec((rows, din_p), lambda i: (i, 0)),  # x, streamed per tile
            wspec((din_p, h_p)), wspec((1, h_p)),           # w1, b1
            wspec((h_p, h_p)),   wspec((1, h_p)),           # w2, b2
            wspec((h_p, h_p)),   wspec((1, h_p)),           # wr1, br1
            wspec((h_p, dout_p)), wspec((1, dout_p)),       # wr2, br2
        ],
        out_specs=pl.BlockSpec((tb, dout_p), lambda i: (i, 0)),
        compiler_params=pltpu.CompilerParams(
            dimension_semantics=("parallel",),              # shard batch tiles across TCs
        ),
    )(x2, w1, b1, w2, b2, wr1, br1, wr2, br2)

    return out[:B, :d_out]


def init_params(key, d_in, hidden, d_out):
    ks = jax.random.split(key, 8)
    scale = 0.1
    return {
        # phi
        "w1": scale * jax.random.normal(ks[0], (d_in, hidden), jnp.float32),
        "b1": scale * jax.random.normal(ks[1], (1, hidden), jnp.float32),
        "w2": scale * jax.random.normal(ks[2], (hidden, hidden), jnp.float32),
        "b2": scale * jax.random.normal(ks[3], (1, hidden), jnp.float32),
        # rho
        "wr1": scale * jax.random.normal(ks[4], (hidden, hidden), jnp.float32),
        "br1": scale * jax.random.normal(ks[5], (1, hidden), jnp.float32),
        "wr2": scale * jax.random.normal(ks[6], (hidden, d_out), jnp.float32),
        "br2": scale * jax.random.normal(ks[7], (1, d_out), jnp.float32),
    }


def reference_forward(x, p):
    """Pure-JAX f32 reference mirroring the PyTorch forward exactly."""
    h = jnp.maximum(x @ p["w1"] + p["b1"], 0.0)
    h = h @ p["w2"] + p["b2"]                       # phi(x): (B, S, H)
    h = jnp.sum(h, axis=1, keepdims=True)           # torch.sum(dim=1, keepdim=True)
    h = h.reshape(h.shape[0], h.shape[2])           # (B, H)
    r = jnp.maximum(h @ p["wr1"] + p["br1"], 0.0)
    return r @ p["wr2"] + p["br2"]                  # rho: (B, Dout)


if __name__ == "__main__":
    B, S, D_IN, HIDDEN, D_OUT = 2, 8, 16, 32, 10

    key = jax.random.PRNGKey(0)
    kx, kp = jax.random.split(key)
    x = jax.random.normal(kx, (B, S, D_IN), jnp.float32)
    params = init_params(kp, D_IN, HIDDEN, D_OUT)

    out = invariant_model(x, params)
    out = jax.block_until_ready(out)

    ref = reference_forward(x, params)
    assert out.shape == (B, D_OUT), out.shape
    # bf16 matmul inputs (f32 accumulation) -> small deviation vs f32 reference.
    assert jnp.allclose(out, ref, atol=5e-2, rtol=5e-2), "mismatch vs reference"

    print("KERNEL_OK")
</pallas_src>

<mosaic_0001>
module attributes {stable_mosaic.version = 11 : i64} {
  func.func @invariant_kernel(%arg0: i32, %arg1: memref<64x128xbf16, #tpu.memory_space<vmem>>, %arg2: memref<128x128xbf16, #tpu.memory_space<vmem>>, %arg3: memref<1x128xf32, #tpu.memory_space<vmem>>, %arg4: memref<128x128xbf16, #tpu.memory_space<vmem>>, %arg5: memref<1x128xf32, #tpu.memory_space<vmem>>, %arg6: memref<128x128xbf16, #tpu.memory_space<vmem>>, %arg7: memref<1x128xf32, #tpu.memory_space<vmem>>, %arg8: memref<128x128xbf16, #tpu.memory_space<vmem>>, %arg9: memref<1x128xf32, #tpu.memory_space<vmem>>, %arg10: memref<8x128xf32, #tpu.memory_space<vmem>>) attributes {dimension_semantics = [#tpu.dimension_semantics<parallel>], iteration_bounds = array<i64: 1>, scalar_prefetch = 0 : i64, scratch_operands = 0 : i64, tpu.core_type = #tpu.core_type<tc>, window_params = [{transform_indices = @transform_0, window_bounds = array<i64: 64, 128>}, {pipeline_mode = #tpu.pipeline_mode<synchronous>, transform_indices = @transform_1, window_bounds = array<i64: 128, 128>}, {pipeline_mode = #tpu.pipeline_mode<synchronous>, transform_indices = @transform_2, window_bounds = array<i64: 1, 128>}, {pipeline_mode = #tpu.pipeline_mode<synchronous>, transform_indices = @transform_3, window_bounds = array<i64: 128, 128>}, {pipeline_mode = #tpu.pipeline_mode<synchronous>, transform_indices = @transform_4, window_bounds = array<i64: 1, 128>}, {pipeline_mode = #tpu.pipeline_mode<synchronous>, transform_indices = @transform_5, window_bounds = array<i64: 128, 128>}, {pipeline_mode = #tpu.pipeline_mode<synchronous>, transform_indices = @transform_6, window_bounds = array<i64: 1, 128>}, {pipeline_mode = #tpu.pipeline_mode<synchronous>, transform_indices = @transform_7, window_bounds = array<i64: 128, 128>}, {pipeline_mode = #tpu.pipeline_mode<synchronous>, transform_indices = @transform_8, window_bounds = array<i64: 1, 128>}, {transform_indices = @transform_9, window_bounds = array<i64: 8, 128>}]} {
    %c0 = arith.constant 0 : index
    %c0_0 = arith.constant 0 : index
    %0 = vector.load %arg1[%c0, %c0_0] : memref<64x128xbf16, #tpu.memory_space<vmem>>, vector<64x128xbf16>
    %c0_1 = arith.constant 0 : index
    %c0_2 = arith.constant 0 : index
    %1 = vector.load %arg2[%c0_1, %c0_2] : memref<128x128xbf16, #tpu.memory_space<vmem>>, vector<128x128xbf16>
    %cst = arith.constant dense<0.000000e+00> : vector<64x128xf32>
    %2 = tpu.matmul %0, %1, %cst {dimension_numbers = #tpu.dot_dimension_numbers<[1], [0], [0], [1], [0, 0, 1, 1], [], []>} : vector<64x128xbf16>, vector<128x128xbf16>, vector<64x128xf32> -> vector<64x128xf32>
    %c0_3 = arith.constant 0 : index
    %c0_4 = arith.constant 0 : index
    %3 = vector.load %arg3[%c0_3, %c0_4] : memref<1x128xf32, #tpu.memory_space<vmem>>, vector<1x128xf32>
    %4 = vector.broadcast %3 : vector<1x128xf32> to vector<64x128xf32>
    %5 = arith.addf %2, %4 : vector<64x128xf32>
    %cst_5 = arith.constant 0.000000e+00 : f32
    %6 = vector.broadcast %cst_5 : f32 to vector<64x128xf32>
    %7 = arith.maximumf %5, %6 : vector<64x128xf32>
    %8 = vector.shape_cast %7 : vector<64x128xf32> to vector<8x8x128xf32>
    %cst_6 = arith.constant dense<0.000000e+00> : vector<8x128xf32>
    %9 = vector.multi_reduction <add>, %8, %cst_6 [1] : vector<8x8x128xf32> to vector<8x128xf32>
    %10 = arith.truncf %9 : vector<8x128xf32> to vector<8x128xbf16>
    %c0_7 = arith.constant 0 : index
    %c0_8 = arith.constant 0 : index
    %11 = vector.load %arg4[%c0_7, %c0_8] : memref<128x128xbf16, #tpu.memory_space<vmem>>, vector<128x128xbf16>
    %cst_9 = arith.constant dense<0.000000e+00> : vector<8x128xf32>
    %12 = tpu.matmul %10, %11, %cst_9 {dimension_numbers = #tpu.dot_dimension_numbers<[1], [0], [0], [1], [0, 0, 1, 1], [], []>} : vector<8x128xbf16>, vector<128x128xbf16>, vector<8x128xf32> -> vector<8x128xf32>
    %c0_10 = arith.constant 0 : index
    %c0_11 = arith.constant 0 : index
    %13 = vector.load %arg5[%c0_10, %c0_11] : memref<1x128xf32, #tpu.memory_space<vmem>>, vector<1x128xf32>
    %cst_12 = arith.constant 8.000000e+00 : f32
    %14 = vector.broadcast %cst_12 : f32 to vector<1x128xf32>
    %15 = arith.mulf %14, %13 : vector<1x128xf32>
    %16 = vector.broadcast %15 : vector<1x128xf32> to vector<8x128xf32>
    %17 = arith.addf %12, %16 : vector<8x128xf32>
    %18 = arith.truncf %17 : vector<8x128xf32> to vector<8x128xbf16>
    %c0_13 = arith.constant 0 : index
    %c0_14 = arith.constant 0 : index
    %19 = vector.load %arg6[%c0_13, %c0_14] : memref<128x128xbf16, #tpu.memory_space<vmem>>, vector<128x128xbf16>
    %cst_15 = arith.constant dense<0.000000e+00> : vector<8x128xf32>
    %20 = tpu.matmul %18, %19, %cst_15 {dimension_numbers = #tpu.dot_dimension_numbers<[1], [0], [0], [1], [0, 0, 1, 1], [], []>} : vector<8x128xbf16>, vector<128x128xbf16>, vector<8x128xf32> -> vector<8x128xf32>
    %c0_16 = arith.constant 0 : index
    %c0_17 = arith.constant 0 : index
    %21 = vector.load %arg7[%c0_16, %c0_17] : memref<1x128xf32, #tpu.memory_space<vmem>>, vector<1x128xf32>
    %22 = vector.broadcast %21 : vector<1x128xf32> to vector<8x128xf32>
    %23 = arith.addf %20, %22 : vector<8x128xf32>
    %cst_18 = arith.constant 0.000000e+00 : f32
    %24 = vector.broadcast %cst_18 : f32 to vector<8x128xf32>
    %25 = arith.maximumf %23, %24 : vector<8x128xf32>
    %26 = arith.truncf %25 : vector<8x128xf32> to vector<8x128xbf16>
    %c0_19 = arith.constant 0 : index
    %c0_20 = arith.constant 0 : index
    %27 = vector.load %arg8[%c0_19, %c0_20] : memref<128x128xbf16, #tpu.memory_space<vmem>>, vector<128x128xbf16>
    %cst_21 = arith.constant dense<0.000000e+00> : vector<8x128xf32>
    %28 = tpu.matmul %26, %27, %cst_21 {dimension_numbers = #tpu.dot_dimension_numbers<[1], [0], [0], [1], [0, 0, 1, 1], [], []>} : vector<8x128xbf16>, vector<128x128xbf16>, vector<8x128xf32> -> vector<8x128xf32>
    %c0_22 = arith.constant 0 : index
    %c0_23 = arith.constant 0 : index
    %29 = vector.load %arg9[%c0_22, %c0_23] : memref<1x128xf32, #tpu.memory_space<vmem>>, vector<1x128xf32>
    %30 = vector.broadcast %29 : vector<1x128xf32> to vector<8x128xf32>
    %31 = arith.addf %28, %30 : vector<8x128xf32>
    %c0_24 = arith.constant 0 : index
    %c0_25 = arith.constant 0 : index
    %32 = vector.load %arg10[%c0_24, %c0_25] : memref<8x128xf32, #tpu.memory_space<vmem>>, vector<8x128xf32>
    tpu.vector_store %arg10[%c0_24, %c0_25], %31 {strides = array<i32>} : memref<8x128xf32, #tpu.memory_space<vmem>>, vector<8x128xf32>,
    return
  }
  func.func @transform_0(%arg0: i32) -> (i32, i32) {
    %c0_i32 = arith.constant 0 : i32
    %c0_i32_0 = arith.constant 0 : i32
    return %arg0, %c0_i32 : i32, i32
  }
  func.func @transform_1(%arg0: i32) -> (i32, i32) {
    %c0_i32 = arith.constant 0 : i32
    %c0_i32_0 = arith.constant 0 : i32
    %c0_i32_1 = arith.constant 0 : i32
    return %c0_i32, %c0_i32_0 : i32, i32
  }
  func.func @transform_2(%arg0: i32) -> (i32, i32) {
    %c0_i32 = arith.constant 0 : i32
    %c0_i32_0 = arith.constant 0 : i32
    %c0_i32_1 = arith.constant 0 : i32
    return %c0_i32, %c0_i32_0 : i32, i32
  }
  func.func @transform_3(%arg0: i32) -> (i32, i32) {
    %c0_i32 = arith.constant 0 : i32
    %c0_i32_0 = arith.constant 0 : i32
    %c0_i32_1 = arith.constant 0 : i32
    return %c0_i32, %c0_i32_0 : i32, i32
  }
  func.func @transform_4(%arg0: i32) -> (i32, i32) {
    %c0_i32 = arith.constant 0 : i32
    %c0_i32_0 = arith.constant 0 : i32
    %c0_i32_1 = arith.constant 0 : i32
    return %c0_i32, %c0_i32_0 : i32, i32
  }
  func.func @transform_5(%arg0: i32) -> (i32, i32) {
    %c0_i32 = arith.constant 0 : i32
    %c0_i32_0 = arith.constant 0 : i32
    %c0_i32_1 = arith.constant 0 : i32
    return %c0_i32, %c0_i32_0 : i32, i32
  }
  func.func @transform_6(%arg0: i32) -> (i32, i32) {
    %c0_i32 = arith.constant 0 : i32
    %c0_i32_0 = arith.constant 0 : i32
    %c0_i32_1 = arith.constant 0 : i32
    return %c0_i32, %c0_i32_0 : i32, i32
  }
  func.func @transform_7(%arg0: i32) -> (i32, i32) {
    %c0_i32 = arith.constant 0 : i32
    %c0_i32_0 = arith.constant 0 : i32
    %c0_i32_1 = arith.constant 0 : i32
    return %c0_i32, %c0_i32_0 : i32, i32
  }
  func.func @transform_8(%arg0: i32) -> (i32, i32) {
    %c0_i32 = arith.constant 0 : i32
    %c0_i32_0 = arith.constant 0 : i32
    %c0_i32_1 = arith.constant 0 : i32
    return %c0_i32, %c0_i32_0 : i32, i32
  }
  func.func @transform_9(%arg0: i32) -> (i32, i32) {
    %c0_i32 = arith.constant 0 : i32
    %c0_i32_0 = arith.constant 0 : i32
    return %arg0, %c0_i32 : i32, i32
  }
}

</mosaic_0001>

<llo_original>
// kernel: tpu_custom_call.1
$region0: #{tpu_custom_call.1}
  #allocation0 [shape = 'u32[]', space=smem, size = 0x4, offset = 0x4, fixed_abs, tag = 'smem constant byte address 0x4 - core index']
  #allocation1 [shape = 'u32[144,128]{1,0:T(1,128)}', space=vmem, size = 0x12000, scoped, tag = 'internal scratch']
  %s0 = inlined_call_operand.hbm [shape: bf16[64,128], index: 0, kind: input, shape index: {}]
  %s1 = inlined_call_operand.hbm [shape: bf16[128,128], index: 1, kind: input, shape index: {}]
  %s2 = inlined_call_operand.vmem [shape: f32[1,128], index: 2, kind: input, shape index: {}]
  %s3 = inlined_call_operand.hbm [shape: bf16[128,128], index: 3, kind: input, shape index: {}]
  %s4 = inlined_call_operand.vmem [shape: f32[1,128], index: 4, kind: input, shape index: {}]
  %s5 = inlined_call_operand.hbm [shape: bf16[128,128], index: 5, kind: input, shape index: {}]
  %s6 = inlined_call_operand.vmem [shape: f32[1,128], index: 6, kind: input, shape index: {}]
  %s7 = inlined_call_operand.hbm [shape: bf16[128,128], index: 7, kind: input, shape index: {}]
  %s8 = inlined_call_operand.vmem [shape: f32[1,128], index: 8, kind: input, shape index: {}]
  %s9 = inlined_call_operand.hbm [shape: f32[8,128], index: 9, kind: output, shape index: {}]
  %s10 = sld [smem:[#allocation0]]
  $region66: #{tpu_custom_call.1} parent=0
    _
  %s12 = ssub.s32 1, %s10
  %s13 = scalar_select 0, %s12, %s10
  $region1: #{tpu_custom_call.1} parent=0
    #allocation2 [shape = 'u8[16384]{0}', space=vmem, size = 0x4000, scoped, tag = 'input window, operand 0, single buffered']
    #allocation3 [shape = 's32[1]{0}', space=sflag, size = 0x4, scoped, tag = 'scoped memory for tpu_custom_call.1']
    #allocation4 [shape = 's32[1]{0}', space=sflag, size = 0x4, scoped, tag = 'scoped memory for tpu_custom_call.1']
    #allocation5 [shape = 'u8[32768]{0}', space=vmem, size = 0x8000, scoped, tag = 'input window, operand 1, single buffered']
    #allocation6 [shape = 's32[1]{0}', space=sflag, size = 0x4, scoped, tag = 'scoped memory for tpu_custom_call.1']
    #allocation7 [shape = 'u8[32768]{0}', space=vmem, size = 0x8000, scoped, tag = 'input window, operand 3, single buffered']
    #allocation8 [shape = 'u8[32768]{0}', space=vmem, size = 0x8000, scoped, tag = 'input window, operand 5, single buffered']
    #allocation9 [shape = 's32[1]{0}', space=sflag, size = 0x4, scoped, tag = 'scoped memory for tpu_custom_call.1']
    #allocation10 [shape = 'u8[32768]{0}', space=vmem, size = 0x8000, scoped, tag = 'input window, operand 7, single buffered']
    #allocation11 [shape = 'u8[4096]{0}', space=vmem, size = 0x1000, scoped, tag = 'output window, operand 0, single buffered']
    %14 = vsyncpa [#allocation3], 0
    %15 = vsyncpa [#allocation6], 0
    %16 = vsyncpa [#allocation9], 0
    %17 = vsyncpa [#allocation4], 0
    // Predicated region
    $region2: #{tpu_custom_call.1} parent=1 // pred_check
      _
    $region3: #{tpu_custom_call.1} parent=1 // pred_check_branch
      %19 = sbr.rel (0) target = $region5
    $region4: #{tpu_custom_call.1} parent=1 // pred_region
      %s21 = ssub.s32 512, 512
      %22 = vsyncadd [#allocation3], %s21
      %s23 = sshll.u32 [#allocation2], 4
      %s24 = int_to_ptr.vmem [resolvable:$true] %s23
      %29 = dma.hbm_to_vmem [thread:$0]  %s0, 512, %s24, [#allocation3], 64, 64, 4
    $region5: #{tpu_custom_call.1} parent=1 // pred_fallthru
      _
    // Predicated region
    $region6: #{tpu_custom_call.1} parent=1 // pred_check
      _
    $region7: #{tpu_custom_call.1} parent=1 // pred_check_branch
      %31 = sbr.rel (0) target = $region9
    $region8: #{tpu_custom_call.1} parent=1 // pred_region
      %s33 = ssub.s32 1024, 1024
      %34 = vsyncadd [#allocation6], %s33
      %s35 = sshll.u32 [#allocation5], 4
      %s36 = int_to_ptr.vmem [resolvable:$true] %s35
      %41 = dma.hbm_to_vmem [thread:$0]  %s1, 1024, %s36, [#allocation6], 64, 64, 4
    $region9: #{tpu_custom_call.1} parent=1 // pred_fallthru
      _
    // Predicated region
    $region10: #{tpu_custom_call.1} parent=1 // pred_check
      _
    $region11: #{tpu_custom_call.1} parent=1 // pred_check_branch
      %43 = sbr.rel (0) target = $region13
    $region12: #{tpu_custom_call.1} parent=1 // pred_region
      _
    $region13: #{tpu_custom_call.1} parent=1 // pred_fallthru
      _
    // Predicated region
    $region14: #{tpu_custom_call.1} parent=1 // pred_check
      _
    $region15: #{tpu_custom_call.1} parent=1 // pred_check_branch
      %45 = sbr.rel (0) target = $region17
    $region16: #{tpu_custom_call.1} parent=1 // pred_region
      %s47 = ssub.s32 1024, 1024
      %48 = vsyncadd [#allocation6], %s47
      %s49 = sshll.u32 [#allocation7], 4
      %s50 = int_to_ptr.vmem [resolvable:$true] %s49
      %55 = dma.hbm_to_vmem [thread:$0]  %s3, 1024, %s50, [#allocation6], 64, 64, 4
    $region17: #{tpu_custom_call.1} parent=1 // pred_fallthru
      _
    // Predicated region
    $region18: #{tpu_custom_call.1} parent=1 // pred_check
      _
    $region19: #{tpu_custom_call.1} parent=1 // pred_check_branch
      %57 = sbr.rel (0) target = $region21
    $region20: #{tpu_custom_call.1} parent=1 // pred_region
      _
    $region21: #{tpu_custom_call.1} parent=1 // pred_fallthru
      _
    // Predicated region
    $region22: #{tpu_custom_call.1} parent=1 // pred_check
      _
    $region23: #{tpu_custom_call.1} parent=1 // pred_check_branch
      %59 = sbr.rel (0) target = $region25
    $region24: #{tpu_custom_call.1} parent=1 // pred_region
      %s61 = ssub.s32 1024, 1024
      %62 = vsyncadd [#allocation9], %s61
      %s63 = sshll.u32 [#allocation8], 4
      %s64 = int_to_ptr.vmem [resolvable:$true] %s63
      %69 = dma.hbm_to_vmem [thread:$0]  %s5, 1024, %s64, [#allocation9], 64, 64, 4
    $region25: #{tpu_custom_call.1} parent=1 // pred_fallthru
      _
    // Predicated region
    $region26: #{tpu_custom_call.1} parent=1 // pred_check
      _
    $region27: #{tpu_custom_call.1} parent=1 // pred_check_branch
      %71 = sbr.rel (0) target = $region29
    $region28: #{tpu_custom_call.1} parent=1 // pred_region
      _
    $region29: #{tpu_custom_call.1} parent=1 // pred_fallthru
      _
    // Predicated region
    $region30: #{tpu_custom_call.1} parent=1 // pred_check
      _
    $region31: #{tpu_custom_call.1} parent=1 // pred_check_branch
      %73 = sbr.rel (0) target = $region33
    $region32: #{tpu_custom_call.1} parent=1 // pred_region
      %s75 = ssub.s32 1024, 1024
      %76 = vsyncadd [#allocation9], %s75
      %s77 = sshll.u32 [#allocation10], 4
      %s78 = int_to_ptr.vmem [resolvable:$true] %s77
      %83 = dma.hbm_to_vmem [thread:$0]  %s7, 1024, %s78, [#allocation9], 64, 64, 4
    $region33: #{tpu_custom_call.1} parent=1 // pred_fallthru
      _
    // Predicated region
    $region34: #{tpu_custom_call.1} parent=1 // pred_check
      _
    $region35: #{tpu_custom_call.1} parent=1 // pred_check_branch
      %85 = sbr.rel (0) target = $region37
    $region36: #{tpu_custom_call.1} parent=1 // pred_region
      _
    $region37: #{tpu_custom_call.1} parent=1 // pred_fallthru
      _
    // Predicated region
    $region38: #{tpu_custom_call.1} parent=1 // pred_check
      _
    $region39: #{tpu_custom_call.1} parent=1 // pred_check_branch
      %87 = sbr.rel (0) target = $region41
    $region40: #{tpu_custom_call.1} parent=1 // pred_region
      %88 = dma.done [#allocation3], 512
    $region41: #{tpu_custom_call.1} parent=1 // pred_fallthru
      _
    // Predicated region
    $region42: #{tpu_custom_call.1} parent=1 // pred_check
      _
    $region43: #{tpu_custom_call.1} parent=1 // pred_check_branch
      %90 = sbr.rel (0) target = $region45
    $region44: #{tpu_custom_call.1} parent=1 // pred_region
      %91 = dma.done [#allocation6], 1024
    $region45: #{tpu_custom_call.1} parent=1 // pred_fallthru
      _
    // Predicated region
    $region46: #{tpu_custom_call.1} parent=1 // pred_check
      _
    $region47: #{tpu_custom_call.1} parent=1 // pred_check_branch
      %93 = sbr.rel (0) target = $region49
    $region48: #{tpu_custom_call.1} parent=1 // pred_region
      %94 = dma.done [#allocation6], 1024
    $region49: #{tpu_custom_call.1} parent=1 // pred_fallthru
      _
    // Predicated region
    $region50: #{tpu_custom_call.1} parent=1 // pred_check
      _
    $region51: #{tpu_custom_call.1} parent=1 // pred_check_branch
      %96 = sbr.rel (0) target = $region53
    $region52: #{tpu_custom_call.1} parent=1 // pred_region
      %97 = dma.done [#allocation9], 1024
    $region53: #{tpu_custom_call.1} parent=1 // pred_fallthru
      _
    // Predicated region
    $region54: #{tpu_custom_call.1} parent=1 // pred_check
      _
    $region55: #{tpu_custom_call.1} parent=1 // pred_check_branch
      %99 = sbr.rel (0) target = $region57
    $region56: #{tpu_custom_call.1} parent=1 // pred_region
      %100 = dma.done [#allocation9], 1024
    $region57: #{tpu_custom_call.1} parent=1 // pred_fallthru
      _
    %v102 = vld [vmem:[#allocation2] sm:$0xf]
    %v103 = vld [vmem:[#allocation2 + $0x4] sm:$0xf]
    %v104 = vld [vmem:[#allocation2 + $0x8] sm:$0xf]
    %v105 = vld [vmem:[#allocation2 + $0xc] sm:$0xf]
    %v106 = vld [vmem:[#allocation2 + $0x10] sm:$0xf]
    %v107 = vld [vmem:[#allocation2 + $0x14] sm:$0xf]
    %v108 = vld [vmem:[#allocation2 + $0x18] sm:$0xf]
    %v109 = vld [vmem:[#allocation2 + $0x1c] sm:$0xf]
    %v110 = vld [vmem:[#allocation5] sm:$0xf]
    %v111 = vld [vmem:[#allocation5 + $0x4] sm:$0xf]
    %v112 = vld [vmem:[#allocation5 + $0x8] sm:$0xf]
    %v113 = vld [vmem:[#allocation5 + $0xc] sm:$0xf]
    %v114 = vld [vmem:[#allocation5 + $0x10] sm:$0xf]
    %v115 = vld [vmem:[#allocation5 + $0x14] sm:$0xf]
    %v116 = vld [vmem:[#allocation5 + $0x18] sm:$0xf]
    %v117 = vld [vmem:[#allocation5 + $0x1c] sm:$0xf]
    %v118 = vld [vmem:[#allocation5 + $0x20] sm:$0xf]
    %v119 = vld [vmem:[#allocation5 + $0x24] sm:$0xf]
    %v120 = vld [vmem:[#allocation5 + $0x28] sm:$0xf]
    %v121 = vld [vmem:[#allocation5 + $0x2c] sm:$0xf]
    %v122 = vld [vmem:[#allocation5 + $0x30] sm:$0xf]
    %v123 = vld [vmem:[#allocation5 + $0x34] sm:$0xf]
    %v124 = vld [vmem:[#allocation5 + $0x38] sm:$0xf]
    %v125 = vld [vmem:[#allocation5 + $0x3c] sm:$0xf]
    %v126 = vld [vmem:[%s2] sm:$0x1]
    %v128 = vlaneseq
    %v129 = vshrl.u32 %v128, 7
    %v130 = vsub.s32 0, %v129
    %v131 = vrot.slane %v126, %v130
    %v141 = vunpack.c.l.b16 %v102
    %v142 = vunpack.c.l.b16 %v103
    %v143 = vunpack.c.l.b16 %v104
    %v144 = vunpack.c.l.b16 %v105
    %v145 = vunpack.c.l.b16 %v106
    %v146 = vunpack.c.l.b16 %v107
    %v147 = vunpack.c.l.b16 %v108
    %v148 = vunpack.c.l.b16 %v109
    %v149 = vpack.c.b16 %v142, %v141
    %v150 = vpack.c.b16 %v144, %v143
    %v151 = vpack.c.b16 %v146, %v145
    %v152 = vpack.c.b16 %v148, %v147
    %v173 = vunpack.c.l.b16 %v110
    %v174 = vunpack.c.l.b16 %v111
    %v175 = vunpack.c.l.b16 %v112
    %v176 = vunpack.c.l.b16 %v113
    %v177 = vunpack.c.l.b16 %v114
    %v178 = vunpack.c.l.b16 %v115
    %v179 = vunpack.c.l.b16 %v116
    %v180 = vunpack.c.l.b16 %v117
    %v181 = vunpack.c.l.b16 %v118
    %v182 = vunpack.c.l.b16 %v119
    %v183 = vunpack.c.l.b16 %v120
    %v184 = vunpack.c.l.b16 %v121
    %v185 = vunpack.c.l.b16 %v122
    %v186 = vunpack.c.l.b16 %v123
    %v187 = vunpack.c.l.b16 %v124
    %v188 = vunpack.c.l.b16 %v125
    %v189 = vpack.c.b16 %v174, %v173
    %v190 = vpack.c.b16 %v176, %v175
    %v191 = vpack.c.b16 %v178, %v177
    %v192 = vpack.c.b16 %v180, %v179
    %v193 = vpack.c.b16 %v182, %v181
    %v194 = vpack.c.b16 %v184, %v183
    %v195 = vpack.c.b16 %v186, %v185
    %v196 = vpack.c.b16 %v188, %v187
    %205 = vmatprep.subr.bf16.mxu0 0
    %206 = vmatpush1.bf16.msra.mxu0 %v196
    %207 = vmatprep.subr.bf16.mxu0 0
    %208 = vmatpush1.bf16.msra.mxu0 %v195
    %209 = vmatprep.subr.bf16.mxu0 0
    %210 = vmatpush1.bf16.msra.mxu0 %v194
    %211 = vmatprep.subr.bf16.mxu0 0
    %212 = vmatpush1.bf16.msra.mxu0 %v193
    %213 = vmatprep.subr.bf16.mxu0 0
    %214 = vmatpush1.bf16.msra.mxu0 %v192
    %215 = vmatprep.subr.bf16.mxu0 0
    %216 = vmatpush1.bf16.msra.mxu0 %v191
    %217 = vmatprep.subr.bf16.mxu0 0
    %218 = vmatpush1.bf16.msra.mxu0 %v190
    %219 = vmatprep.subr.bf16.mxu0 0
    %220 = vmatpush1.bf16.msra.mxu0 %v189
    %221 = vmatprep.subr.bf16.mxu0 0
    %222 = vmatpush2.bf16.msra.mxu0 0
    %223 = vmatprep.subr.bf16.mxu0 0
    %224 = vmatpush2.bf16.msra.mxu0 0
    %225 = vmatprep.subr.bf16.mxu0 0
    %226 = vmatpush2.bf16.msra.mxu0 0
    %227 = vmatprep.subr.bf16.mxu0 0
    %228 = vmatpush2.bf16.msra.mxu0 0
    %229 = vmatprep.subr.bf16.mxu0 0
    %230 = vmatpush2.bf16.msra.mxu0 0
    %231 = vmatprep.subr.bf16.mxu0 0
    %232 = vmatpush2.bf16.msra.mxu0 0
    %233 = vmatprep.subr.bf16.mxu0 0
    %234 = vmatpush2.bf16.msra.mxu0 0
    %235 = vmatprep.subr.bf16.mxu0 0
    %236 = vmatpush2.bf16.msra.mxu0 0
    %237 = vmatprep.mubr.bf16.mxu0 0
    %238 = vmatmul.mubr.bf16.gmra.mxu0 %v149
    %v239 = vpop.f32.mrf.mxu0
    %v240 = vadd.f32 %v131, %v239
    %v241 = vpop.f32.mrf.mxu0
    %v242 = vpop.f32.mrf.mxu0
    %v243 = vadd.f32 %v131, %v242
    %v244 = vpop.f32.mrf.mxu0
    %245 = vmatprep.mubr.bf16.mxu0 0
    %246 = vmatmul.mubr.bf16.gmra.mxu0 %v150
    %v247 = vpop.f32.mrf.mxu0
    %v248 = vadd.f32 %v131, %v247
    %v249 = vpop.f32.mrf.mxu0
    %v250 = vpop.f32.mrf.mxu0
    %v251 = vadd.f32 %v131, %v250
    %v252 = vpop.f32.mrf.mxu0
    %253 = vmatprep.mubr.bf16.mxu0 0
    %254 = vmatmul.mubr.bf16.gmra.mxu0 %v151
    %v255 = vpop.f32.mrf.mxu0
    %v256 = vadd.f32 %v131, %v255
    %v257 = vpop.f32.mrf.mxu0
    %v258 = vpop.f32.mrf.mxu0
    %v259 = vadd.f32 %v131, %v258
    %v260 = vpop.f32.mrf.mxu0
    %261 = vmatprep.mubr.bf16.mxu0 0
    %262 = vmatmul.mubr.bf16.gmra.mxu0 %v152
    %v263 = vpop.f32.mrf.mxu0
    %v264 = vadd.f32 %v131, %v263
    %v265 = vpop.f32.mrf.mxu0
    %v266 = vpop.f32.mrf.mxu0
    %v267 = vadd.f32 %v131, %v266
    %v268 = vpop.f32.mrf.mxu0
    %269 = vdwg.mxu0
    %v270 = vmax.f32 %v240, 0.0
    %v271 = vmax.f32 %v243, 0.0
    %v272 = vmax.f32 %v248, 0.0
    %v273 = vmax.f32 %v251, 0.0
    %v274 = vmax.f32 %v256, 0.0
    %v275 = vmax.f32 %v259, 0.0
    %v276 = vmax.f32 %v264, 0.0
    %v277 = vmax.f32 %v267, 0.0
    %v278 = vrot.slane %v270, 4
    %v279 = vadd.f32 %v270, %v278
    %v280 = vrot.slane %v279, 2
    %v281 = vadd.f32 %v279, %v280
    %v282 = vrot.slane %v281, 1
    %v283 = vadd.f32 %v281, %v282
    %v284 = vrot.slane %v271, 4
    %v285 = vadd.f32 %v271, %v284
    %v286 = vrot.slane %v285, 2
    %v287 = vadd.f32 %v285, %v286
    %v288 = vrot.slane %v287, 1
    %v289 = vadd.f32 %v287, %v288
    %v290 = vrot.slane %v272, 4
    %v291 = vadd.f32 %v272, %v290
    %v292 = vrot.slane %v291, 2
    %v293 = vadd.f32 %v291, %v292
    %v294 = vrot.slane %v293, 1
    %v295 = vadd.f32 %v293, %v294
    %v296 = vrot.slane %v273, 4
    %v297 = vadd.f32 %v273, %v296
    %v298 = vrot.slane %v297, 2
    %v299 = vadd.f32 %v297, %v298
    %v300 = vrot.slane %v299, 1
    %v301 = vadd.f32 %v299, %v300
    %v302 = vrot.slane %v274, 4
    %v303 = vadd.f32 %v274, %v302
    %v304 = vrot.slane %v303, 2
    %v305 = vadd.f32 %v303, %v304
    %v306 = vrot.slane %v305, 1
    %v307 = vadd.f32 %v305, %v306
    %v308 = vrot.slane %v275, 4
    %v309 = vadd.f32 %v275, %v308
    %v310 = vrot.slane %v309, 2
    %v311 = vadd.f32 %v309, %v310
    %v312 = vrot.slane %v311, 1
    %v313 = vadd.f32 %v311, %v312
    %v314 = vrot.slane %v276, 4
    %v315 = vadd.f32 %v276, %v314
    %v316 = vrot.slane %v315, 2
    %v317 = vadd.f32 %v315, %v316
    %v318 = vrot.slane %v317, 1
    %v319 = vadd.f32 %v317, %v318
    %v320 = vrot.slane %v277, 4
    %v321 = vadd.f32 %v277, %v320
    %v322 = vrot.slane %v321, 2
    %v323 = vadd.f32 %v321, %v322
    %v324 = vrot.slane %v323, 1
    %v325 = vadd.f32 %v323, %v324
    %v326 = vpack.c.bf16 %v283, %v283
    %v327 = vpack.c.bf16 %v289, %v289
    %v328 = vpack.c.bf16 %v295, %v295
    %v329 = vpack.c.bf16 %v301, %v301
    %v330 = vpack.c.bf16 %v307, %v307
    %v331 = vpack.c.bf16 %v313, %v313
    %v332 = vpack.c.bf16 %v319, %v319
    %v333 = vpack.c.bf16 %v325, %v325
    %v334 = vld [vmem:[#allocation7] sm:$0xf]
    %v335 = vld [vmem:[#allocation7 + $0x4] sm:$0xf]
    %v336 = vld [vmem:[#allocation7 + $0x8] sm:$0xf]
    %v337 = vld [vmem:[#allocation7 + $0xc] sm:$0xf]
    %v338 = vld [vmem:[#allocation7 + $0x10] sm:$0xf]
    %v339 = vld [vmem:[#allocation7 + $0x14] sm:$0xf]
    %v340 = vld [vmem:[#allocation7 + $0x18] sm:$0xf]
    %v341 = vld [vmem:[#allocation7 + $0x1c] sm:$0xf]
    %v342 = vld [vmem:[#allocation7 + $0x20] sm:$0xf]
    %v343 = vld [vmem:[#allocation7 + $0x24] sm:$0xf]
    %v344 = vld [vmem:[#allocation7 + $0x28] sm:$0xf]
    %v345 = vld [vmem:[#allocation7 + $0x2c] sm:$0xf]
    %v346 = vld [vmem:[#allocation7 + $0x30] sm:$0xf]
    %v347 = vld [vmem:[#allocation7 + $0x34] sm:$0xf]
    %v348 = vld [vmem:[#allocation7 + $0x38] sm:$0xf]
    %v349 = vld [vmem:[#allocation7 + $0x3c] sm:$0xf]
    %v350 = vld [vmem:[%s4] sm:$0x1]
    %v351 = vmul.f32 %v350, 8.0
    %v353 = vlaneseq
    %v354 = vshrl.u32 %v353, 7
    %v355 = vsub.s32 0, %v354
    %v356 = vrot.slane %v351, %v355
    %v366 = vunpack.c.l.b16 %v326
    %v367 = vunpack.c.l.b16 %v327
    %v368 = vunpack.c.l.b16 %v328
    %v369 = vunpack.c.l.b16 %v329
    %v370 = vunpack.c.l.b16 %v330
    %v371 = vunpack.c.l.b16 %v331
    %v372 = vunpack.c.l.b16 %v332
    %v373 = vunpack.c.l.b16 %v333
    %vm374 = vcmask 1041409
    %v375 = vsel %vm374, %v367, %v366
    %vm376 = vcmask 1042434
    %v377 = vsel %vm376, %v368, %v375
    %vm378 = vcmask 1043459
    %v379 = vsel %vm378, %v369, %v377
    %vm380 = vcmask 1044484
    %v381 = vsel %vm380, %v370, %v379
    %vm382 = vcmask 1045509
    %v383 = vsel %vm382, %v371, %v381
    %vm384 = vcmask 1046534
    %v385 = vsel %vm384, %v372, %v383
    %vm386 = vcmask 1047559
    %v387 = vsel %vm386, %v373, %v385
    %v388 = vpack.c.b16 %v387, %v387
    %v406 = vunpack.c.l.b16 %v334
    %v407 = vunpack.c.l.b16 %v335
    %v408 = vunpack.c.l.b16 %v336
    %v409 = vunpack.c.l.b16 %v337
    %v410 = vunpack.c.l.b16 %v338
    %v411 = vunpack.c.l.b16 %v339
    %v412 = vunpack.c.l.b16 %v340
    %v413 = vunpack.c.l.b16 %v341
    %v414 = vunpack.c.l.b16 %v342
    %v415 = vunpack.c.l.b16 %v343
    %v416 = vunpack.c.l.b16 %v344
    %v417 = vunpack.c.l.b16 %v345
    %v418 = vunpack.c.l.b16 %v346
    %v419 = vunpack.c.l.b16 %v347
    %v420 = vunpack.c.l.b16 %v348
    %v421 = vunpack.c.l.b16 %v349
    %v422 = vpack.c.b16 %v407, %v406
    %v423 = vpack.c.b16 %v409, %v408
    %v424 = vpack.c.b16 %v411, %v410
    %v425 = vpack.c.b16 %v413, %v412
    %v426 = vpack.c.b16 %v415, %v414
    %v427 = vpack.c.b16 %v417, %v416
    %v428 = vpack.c.b16 %v419, %v418
    %v429 = vpack.c.b16 %v421, %v420
    %438 = vmatprep.subr.bf16.mxu0 0
    %439 = vmatpush1.bf16.msra.mxu0 %v429
    %440 = vmatprep.subr.bf16.mxu0 0
    %441 = vmatpush1.bf16.msra.mxu0 %v428
    %442 = vmatprep.subr.bf16.mxu0 0
    %443 = vmatpush1.bf16.msra.mxu0 %v427
    %444 = vmatprep.subr.bf16.mxu0 0
    %445 = vmatpush1.bf16.msra.mxu0 %v426
    %446 = vmatprep.subr.bf16.mxu0 0
    %447 = vmatpush1.bf16.msra.mxu0 %v425
    %448 = vmatprep.subr.bf16.mxu0 0
    %449 = vmatpush1.bf16.msra.mxu0 %v424
    %450 = vmatprep.subr.bf16.mxu0 0
    %451 = vmatpush1.bf16.msra.mxu0 %v423
    %452 = vmatprep.subr.bf16.mxu0 0
    %453 = vmatpush1.bf16.msra.mxu0 %v422
    %454 = vmatprep.subr.bf16.mxu0 0
    %455 = vmatpush2.bf16.msra.mxu0 0
    %456 = vmatprep.subr.bf16.mxu0 0
    %457 = vmatpush2.bf16.msra.mxu0 0
    %458 = vmatprep.subr.bf16.mxu0 0
    %459 = vmatpush2.bf16.msra.mxu0 0
    %460 = vmatprep.subr.bf16.mxu0 0
    %461 = vmatpush2.bf16.msra.mxu0 0
    %462 = vmatprep.subr.bf16.mxu0 0
    %463 = vmatpush2.bf16.msra.mxu0 0
    %464 = vmatprep.subr.bf16.mxu0 0
    %465 = vmatpush2.bf16.msra.mxu0 0
    %466 = vmatprep.subr.bf16.mxu0 0
    %467 = vmatpush2.bf16.msra.mxu0 0
    %468 = vmatprep.subr.bf16.mxu0 0
    %469 = vmatpush2.bf16.msra.mxu0 0
    %470 = vmatprep.mubr.bf16.mxu0 0
    %471 = vmatmul.mubr.bf16.gmra.mxu0 %v388
    %v472 = vpop.f32.mrf.mxu0
    %v473 = vadd.f32 %v356, %v472
    %v474 = vpop.f32.mrf.mxu0
    %v475 = vpop.f32.mrf.mxu0
    %v476 = vpop.f32.mrf.mxu0
    %477 = vdwg.mxu0
    %v478 = vpack.c.bf16 %v473, %v473
    %v479 = vld [vmem:[#allocation8] sm:$0xf]
    %v480 = vld [vmem:[#allocation8 + $0x4] sm:$0xf]
    %v481 = vld [vmem:[#allocation8 + $0x8] sm:$0xf]
    %v482 = vld [vmem:[#allocation8 + $0xc] sm:$0xf]
    %v483 = vld [vmem:[#allocation8 + $0x10] sm:$0xf]
    %v484 = vld [vmem:[#allocation8 + $0x14] sm:$0xf]
    %v485 = vld [vmem:[#allocation8 + $0x18] sm:$0xf]
    %v486 = vld [vmem:[#allocation8 + $0x1c] sm:$0xf]
    %v487 = vld [vmem:[#allocation8 + $0x20] sm:$0xf]
    %v488 = vld [vmem:[#allocation8 + $0x24] sm:$0xf]
    %v489 = vld [vmem:[#allocation8 + $0x28] sm:$0xf]
    %v490 = vld [vmem:[#allocation8 + $0x2c] sm:$0xf]
    %v491 = vld [vmem:[#allocation8 + $0x30] sm:$0xf]
    %v492 = vld [vmem:[#allocation8 + $0x34] sm:$0xf]
    %v493 = vld [vmem:[#allocation8 + $0x38] sm:$0xf]
    %v494 = vld [vmem:[#allocation8 + $0x3c] sm:$0xf]
    %v495 = vld [vmem:[%s6] sm:$0x1]
    %v497 = vlaneseq
    %v498 = vshrl.u32 %v497, 7
    %v499 = vsub.s32 0, %v498
    %v500 = vrot.slane %v495, %v499
    %v518 = vunpack.c.l.b16 %v479
    %v519 = vunpack.c.l.b16 %v480
    %v520 = vunpack.c.l.b16 %v481
    %v521 = vunpack.c.l.b16 %v482
    %v522 = vunpack.c.l.b16 %v483
    %v523 = vunpack.c.l.b16 %v484
    %v524 = vunpack.c.l.b16 %v485
    %v525 = vunpack.c.l.b16 %v486
    %v526 = vunpack.c.l.b16 %v487
    %v527 = vunpack.c.l.b16 %v488
    %v528 = vunpack.c.l.b16 %v489
    %v529 = vunpack.c.l.b16 %v490
    %v530 = vunpack.c.l.b16 %v491
    %v531 = vunpack.c.l.b16 %v492
    %v532 = vunpack.c.l.b16 %v493
    %v533 = vunpack.c.l.b16 %v494
    %v534 = vpack.c.b16 %v519, %v518
    %v535 = vpack.c.b16 %v521, %v520
    %v536 = vpack.c.b16 %v523, %v522
    %v537 = vpack.c.b16 %v525, %v524
    %v538 = vpack.c.b16 %v527, %v526
    %v539 = vpack.c.b16 %v529, %v528
    %v540 = vpack.c.b16 %v531, %v530
    %v541 = vpack.c.b16 %v533, %v532
    %550 = vmatprep.subr.bf16.mxu0 0
    %551 = vmatpush1.bf16.msra.mxu0 %v541
    %552 = vmatprep.subr.bf16.mxu0 0
    %553 = vmatpush1.bf16.msra.mxu0 %v540
    %554 = vmatprep.subr.bf16.mxu0 0
    %555 = vmatpush1.bf16.msra.mxu0 %v539
    %556 = vmatprep.subr.bf16.mxu0 0
    %557 = vmatpush1.bf16.msra.mxu0 %v538
    %558 = vmatprep.subr.bf16.mxu0 0
    %559 = vmatpush1.bf16.msra.mxu0 %v537
    %560 = vmatprep.subr.bf16.mxu0 0
    %561 = vmatpush1.bf16.msra.mxu0 %v536
    %562 = vmatprep.subr.bf16.mxu0 0
    %563 = vmatpush1.bf16.msra.mxu0 %v535
    %564 = vmatprep.subr.bf16.mxu0 0
    %565 = vmatpush1.bf16.msra.mxu0 %v534
    %566 = vmatprep.subr.bf16.mxu0 0
    %567 = vmatpush2.bf16.msra.mxu0 0
    %568 = vmatprep.subr.bf16.mxu0 0
    %569 = vmatpush2.bf16.msra.mxu0 0
    %570 = vmatprep.subr.bf16.mxu0 0
    %571 = vmatpush2.bf16.msra.mxu0 0
    %572 = vmatprep.subr.bf16.mxu0 0
    %573 = vmatpush2.bf16.msra.mxu0 0
    %574 = vmatprep.subr.bf16.mxu0 0
    %575 = vmatpush2.bf16.msra.mxu0 0
    %576 = vmatprep.subr.bf16.mxu0 0
    %577 = vmatpush2.bf16.msra.mxu0 0
    %578 = vmatprep.subr.bf16.mxu0 0
    %579 = vmatpush2.bf16.msra.mxu0 0
    %580 = vmatprep.subr.bf16.mxu0 0
    %581 = vmatpush2.bf16.msra.mxu0 0
    %582 = vmatprep.mubr.bf16.mxu0 0
    %583 = vmatmul.mubr.bf16.gmra.mxu0 %v478
    %v584 = vpop.f32.mrf.mxu0
    %v585 = vadd.f32 %v500, %v584
    %v586 = vpop.f32.mrf.mxu0
    %v587 = vpop.f32.mrf.mxu0
    %v588 = vpop.f32.mrf.mxu0
    %589 = vdwg.mxu0
    %v590 = vmax.f32 %v585, 0.0
    %v591 = vpack.c.bf16 %v590, %v590
    %v592 = vld [vmem:[#allocation10] sm:$0xf]
    %v593 = vld [vmem:[#allocation10 + $0x4] sm:$0xf]
    %v594 = vld [vmem:[#allocation10 + $0x8] sm:$0xf]
    %v595 = vld [vmem:[#allocation10 + $0xc] sm:$0xf]
    %v596 = vld [vmem:[#allocation10 + $0x10] sm:$0xf]
    %v597 = vld [vmem:[#allocation10 + $0x14] sm:$0xf]
    %v598 = vld [vmem:[#allocation10 + $0x18] sm:$0xf]
    %v599 = vld [vmem:[#allocation10 + $0x1c] sm:$0xf]
    %v600 = vld [vmem:[#allocation10 + $0x20] sm:$0xf]
    %v601 = vld [vmem:[#allocation10 + $0x24] sm:$0xf]
    %v602 = vld [vmem:[#allocation10 + $0x28] sm:$0xf]
    %v603 = vld [vmem:[#allocation10 + $0x2c] sm:$0xf]
    %v604 = vld [vmem:[#allocation10 + $0x30] sm:$0xf]
    %v605 = vld [vmem:[#allocation10 + $0x34] sm:$0xf]
    %v606 = vld [vmem:[#allocation10 + $0x38] sm:$0xf]
    %v607 = vld [vmem:[#allocation10 + $0x3c] sm:$0xf]
    %v608 = vld [vmem:[%s8] sm:$0x1]
    %v610 = vlaneseq
    %v611 = vshrl.u32 %v610, 7
    %v612 = vsub.s32 0, %v611
    %v613 = vrot.slane %v608, %v612
    %v631 = vunpack.c.l.b16 %v592
    %v632 = vunpack.c.l.b16 %v593
    %v633 = vunpack.c.l.b16 %v594
    %v634 = vunpack.c.l.b16 %v595
    %v635 = vunpack.c.l.b16 %v596
    %v636 = vunpack.c.l.b16 %v597
    %v637 = vunpack.c.l.b16 %v598
    %v638 = vunpack.c.l.b16 %v599
    %v639 = vunpack.c.l.b16 %v600
    %v640 = vunpack.c.l.b16 %v601
    %v641 = vunpack.c.l.b16 %v602
    %v642 = vunpack.c.l.b16 %v603
    %v643 = vunpack.c.l.b16 %v604
    %v644 = vunpack.c.l.b16 %v605
    %v645 = vunpack.c.l.b16 %v606
    %v646 = vunpack.c.l.b16 %v607
    %v647 = vpack.c.b16 %v632, %v631
    %v648 = vpack.c.b16 %v634, %v633
    %v649 = vpack.c.b16 %v636, %v635
    %v650 = vpack.c.b16 %v638, %v637
    %v651 = vpack.c.b16 %v640, %v639
    %v652 = vpack.c.b16 %v642, %v641
    %v653 = vpack.c.b16 %v644, %v643
    %v654 = vpack.c.b16 %v646, %v645
    %663 = vmatprep.subr.bf16.mxu0 0
    %664 = vmatpush1.bf16.msra.mxu0 %v654
    %665 = vmatprep.subr.bf16.mxu0 0
    %666 = vmatpush1.bf16.msra.mxu0 %v653
    %667 = vmatprep.subr.bf16.mxu0 0
    %668 = vmatpush1.bf16.msra.mxu0 %v652
    %669 = vmatprep.subr.bf16.mxu0 0
    %670 = vmatpush1.bf16.msra.mxu0 %v651
    %671 = vmatprep.subr.bf16.mxu0 0
    %672 = vmatpush1.bf16.msra.mxu0 %v650
    %673 = vmatprep.subr.bf16.mxu0 0
    %674 = vmatpush1.bf16.msra.mxu0 %v649
    %675 = vmatprep.subr.bf16.mxu0 0
    %676 = vmatpush1.bf16.msra.mxu0 %v648
    %677 = vmatprep.subr.bf16.mxu0 0
    %678 = vmatpush1.bf16.msra.mxu0 %v647
    %679 = vmatprep.subr.bf16.mxu0 0
    %680 = vmatpush2.bf16.msra.mxu0 0
    %681 = vmatprep.subr.bf16.mxu0 0
    %682 = vmatpush2.bf16.msra.mxu0 0
    %683 = vmatprep.subr.bf16.mxu0 0
    %684 = vmatpush2.bf16.msra.mxu0 0
    %685 = vmatprep.subr.bf16.mxu0 0
    %686 = vmatpush2.bf16.msra.mxu0 0
    %687 = vmatprep.subr.bf16.mxu0 0
    %688 = vmatpush2.bf16.msra.mxu0 0
    %689 = vmatprep.subr.bf16.mxu0 0
    %690 = vmatpush2.bf16.msra.mxu0 0
    %691 = vmatprep.subr.bf16.mxu0 0
    %692 = vmatpush2.bf16.msra.mxu0 0
    %693 = vmatprep.subr.bf16.mxu0 0
    %694 = vmatpush2.bf16.msra.mxu0 0
    %695 = vmatprep.mubr.bf16.mxu0 0
    %696 = vmatmul.mubr.bf16.gmra.mxu0 %v591
    %v697 = vpop.f32.mrf.mxu0
    %v698 = vadd.f32 %v613, %v697
    %v699 = vpop.f32.mrf.mxu0
    %v700 = vpop.f32.mrf.mxu0
    %v701 = vpop.f32.mrf.mxu0
    %702 = vdwg.mxu0
    %703 = vst [vmem:[#allocation11] sm:$0xff] %v698
    // Predicated region
    $region58: #{tpu_custom_call.1} parent=1 // pred_check
      _
    $region59: #{tpu_custom_call.1} parent=1 // pred_check_branch
      %705 = sbr.rel (0) target = $region61
    $region60: #{tpu_custom_call.1} parent=1 // pred_region
      %s707 = ssub.s32 128, 128
      %708 = vsyncadd [#allocation4], %s707
      %s710 = sshll.u32 [#allocation11], 4
      %s711 = int_to_ptr.vmem [resolvable:$true] %s710
      %713 = dma.vmem_to_hbm [thread:$0]  %s711, 128, %s9, [#allocation4]
    $region61: #{tpu_custom_call.1} parent=1 // pred_fallthru
      _
    // Predicated region
    $region62: #{tpu_custom_call.1} parent=1 // pred_check
      _
    $region63: #{tpu_custom_call.1} parent=1 // pred_check_branch
      %715 = sbr.rel (0) target = $region65
    $region64: #{tpu_custom_call.1} parent=1 // pred_region
      %716 = dma.done [#allocation4], 128
    $region65: #{tpu_custom_call.1} parent=1 // pred_fallthru
      _
    %717 = vsyncpa [#allocation3], 1
    %718 = vsyncpa [#allocation6], 1
    %719 = vsyncpa [#allocation9], 1
    %720 = vsyncpa [#allocation4], 1

</llo_original>
